<compile_context>
chip_gen: v6e
topology: v6e:2x2x1
jax: 0.10.0
libtpu: 0.0.40
codegen_flags: <defaults>
</compile_context>

<pallas_src>
import functools

import jax
import jax.numpy as jnp
from jax.experimental import pallas as pl
from jax.experimental.pallas import tpu as pltpu


def _round_up(x, m):
    return ((x + m - 1) // m) * m


# ----------------------------------------------------------------------------
# Fused kernel: logits = x @ W + b  ->  greedy argmax  ->  token mismatch count
# ----------------------------------------------------------------------------
def _wer_fused_kernel(xr_ref, xf_ref, w_ref, b_ref, out_ref,
                      acc_r, acc_f, max_r, max_f, arg_r, arg_f,
                      *, m_valid):
    i = pl.program_id(0)          # M (row) tile
    j = pl.program_id(1)          # V (vocab) tile
    k = pl.program_id(2)          # D (feature / contraction) tile
    nj = pl.num_programs(1)
    nk = pl.num_programs(2)
    tm, tn = acc_r.shape

    # ---- reset logits accumulators at the start of each K sweep -------------
    @pl.when(k == 0)
    def _():
        acc_r[...] = jnp.zeros_like(acc_r)
        acc_f[...] = jnp.zeros_like(acc_f)

    # ---- MXU matmul (bf16 inputs, f32 accumulation), shared W tile ----------
    w_tile = w_ref[...]
    acc_r[...] += jnp.dot(xr_ref[...], w_tile, preferred_element_type=jnp.float32)
    acc_f[...] += jnp.dot(xf_ref[...], w_tile, preferred_element_type=jnp.float32)

    # ---- after the last K tile: fold this V tile into the running argmax ----
    @pl.when(k == nk - 1)
    def _():
        @pl.when(j == 0)
        def _():
            max_r[...] = jnp.full_like(max_r, -jnp.inf)
            max_f[...] = jnp.full_like(max_f, -jnp.inf)
            arg_r[...] = jnp.zeros_like(arg_r)
            arg_f[...] = jnp.zeros_like(arg_f)

        bias = b_ref[...]                                              # (1, tn)
        col = jax.lax.broadcasted_iota(jnp.int32, (tm, tn), 1) + j * tn

        def _update(acc_ref, max_ref, arg_ref):
            logits = acc_ref[...] + bias                               # (tm, tn)
            tile_max = jnp.max(logits, axis=-1, keepdims=True)         # (tm, 1)
            cand = jnp.where(logits >= tile_max, col, jnp.int32(2 ** 30))
            tile_arg = jnp.min(cand, axis=-1, keepdims=True)           # (tm, 1)
            better = tile_max > max_ref[...]       # strict > : earlier tile wins ties
            arg_ref[...] = jnp.where(better, tile_arg, arg_ref[...])
            max_ref[...] = jnp.maximum(max_ref[...], tile_max)

        _update(acc_r, max_r, arg_r)
        _update(acc_f, max_f, arg_f)

        # ---- after the last V tile: emit this row-tile's mismatch count -----
        @pl.when(j == nj - 1)
        def _():
            row = jax.lax.broadcasted_iota(jnp.int32, (tm, 1), 0) + i * tm
            valid = row < m_valid                  # mask zero-padded remainder rows
            mism = jnp.logical_and(valid, arg_r[...] != arg_f[...])
            count = jnp.sum(mism.astype(jnp.float32))
            # lane-dense (8,128) store of the scalar partial count
            out_ref[...] = jnp.full(out_ref.shape, count, dtype=jnp.float32)


# ----------------------------------------------------------------------------
# Wrapper reproducing WER_Model.forward(audio_real, audio_fake) semantics on
# synthetic feature tensors instead of file paths.
# ----------------------------------------------------------------------------
# TODO(synk): true WER needs a string-level Levenshtein DP over word tokens of
# possibly different lengths (external pretrained ASR output); both decoded
# sequences have identical length here, so a substitution-only rate is used.
def wer_model_forward(feats_real, feats_fake, w, b, *, tm=256, tn=512, tk=512):
    B, T, D = feats_real.shape
    V = w.shape[1]
    M = B * T

    # --- tile sizes honouring TPU (8, 128) layout constraints -----------------
    tm = min(tm, _round_up(M, 8))
    Mp = _round_up(M, tm)
    tn = min(tn, _round_up(V, 128))
    Vp = _round_up(V, tn)
    if not (tk % 128 == 0 and D % tk == 0):
        tk = D                                   # no K tiling unless lane-aligned

    # --- pad + cast (bf16 MXU operands, f32 accumulation, f32 bias) ----------
    xr = feats_real.reshape(M, D)
    xf = feats_fake.reshape(M, D)
    if Mp != M:
        xr = jnp.pad(xr, ((0, Mp - M), (0, 0)))
        xf = jnp.pad(xf, ((0, Mp - M), (0, 0)))
    xr = xr.astype(jnp.bfloat16)
    xf = xf.astype(jnp.bfloat16)

    w_p = w
    b_p = b.reshape(1, V).astype(jnp.float32)
    if Vp != V:
        w_p = jnp.pad(w_p, ((0, 0), (0, Vp - V)))
        # padded vocab columns get a huge negative bias so argmax never picks them
        b_p = jnp.pad(b_p, ((0, 0), (0, Vp - V)), constant_values=-1e30)
    w_p = w_p.astype(jnp.bfloat16)

    gm, gn, gk = Mp // tm, Vp // tn, D // tk

    cost = pl.CostEstimate(
        flops=2 * 2 * Mp * D * Vp,                                   # two clips
        transcendentals=0,
        bytes_accessed=(2 * Mp * D * 2) + gm * (D * Vp * 2 + Vp * 4)
                       + gm * 8 * 128 * 4,
    )

    kernel = functools.partial(_wer_fused_kernel, m_valid=M)

    counts = pl.pallas_call(
        kernel,
        out_shape=jax.ShapeDtypeStruct((gm, 8, 128), jnp.float32),
        grid_spec=pltpu.PrefetchScalarGridSpec(
            num_scalar_prefetch=0,
            grid=(gm, gn, gk),
            in_specs=[
                pl.BlockSpec((tm, tk), lambda i, j, k: (i, k)),      # x real
                pl.BlockSpec((tm, tk), lambda i, j, k: (i, k)),      # x fake
                pl.BlockSpec((tk, tn), lambda i, j, k: (k, j)),      # W
                pl.BlockSpec((1, tn), lambda i, j, k: (0, j)),       # bias
            ],
            out_specs=pl.BlockSpec((1, 8, 128), lambda i, j, k: (i, 0, 0)),
            scratch_shapes=[
                pltpu.VMEM((tm, tn), jnp.float32),   # acc_r
                pltpu.VMEM((tm, tn), jnp.float32),   # acc_f
                pltpu.VMEM((tm, 1), jnp.float32),    # running max (real)
                pltpu.VMEM((tm, 1), jnp.float32),    # running max (fake)
                pltpu.VMEM((tm, 1), jnp.int32),      # running argmax (real)
                pltpu.VMEM((tm, 1), jnp.int32),      # running argmax (fake)
            ],
        ),
        compiler_params=pltpu.CompilerParams(
            # per-M-tile partial counts -> the row axis is independent and can
            # be sharded across TensorCores (v7x megacore); V and D reduce into
            # resident scratch, so they stay "arbitrary".
            dimension_semantics=("parallel", "arbitrary", "arbitrary"),
            vmem_limit_bytes=64 * 1024 * 1024,
        ),
        cost_estimate=cost,
    )(xr, xf, w_p, b_p)

    # tiny finalize: sum per-tile counts and normalize by the valid row count
    return jnp.sum(counts[:, 0, 0]) / jnp.float32(M)


# ----------------------------------------------------------------------------
# Plain-JAX reference with matching (bf16 in / f32 acc) numerics.
# ----------------------------------------------------------------------------
def _ref_wer(feats_real, feats_fake, w, b):
    D = feats_real.shape[-1]

    def ids(x):
        logits = jnp.dot(x.reshape(-1, D).astype(jnp.bfloat16),
                         w.astype(jnp.bfloat16),
                         preferred_element_type=jnp.float32) + b.reshape(1, -1)
        return jnp.argmax(logits, axis=-1)

    ir, iff = ids(feats_real), ids(feats_fake)
    return jnp.mean((ir != iff).astype(jnp.float32))


if __name__ == "__main__":
    # Small, deterministic synthetic shapes: B=2 clips, T=8 frames, D=32 feature
    # dim, V=64 "vocab" tokens.
    B, T, D, V = 2, 8, 32, 64
    key = jax.random.PRNGKey(0)
    k1, k2, k3, k4 = jax.random.split(key, 4)

    feats_real = jax.random.normal(k1, (B, T, D), dtype=jnp.float32)
    # fake clip = perturbed real clip
    feats_fake = feats_real + 0.5 * jax.random.normal(k2, (B, T, D), dtype=jnp.float32)

    # Deterministic "acoustic model head" parameters.
    w = jax.random.normal(k3, (D, V), dtype=jnp.float32) / jnp.sqrt(D)
    b = 0.01 * jax.random.normal(k4, (1, V), dtype=jnp.float32)

    wer = wer_model_forward(feats_real, feats_fake, w, b)
    wer = jax.block_until_ready(wer)

    assert wer.shape == () and wer.dtype == jnp.float32
    assert 0.0 <= float(wer) <= 1.0

    ref = jax.block_until_ready(_ref_wer(feats_real, feats_fake, w, b))
    assert abs(float(wer) - float(ref)) < 1e-6, (float(wer), float(ref))

    print("KERNEL_OK")
</pallas_src>

<mosaic_0001>
module attributes {stable_mosaic.version = 11 : i64} {
  func.func @_wer_fused_kernel(%arg0: i32, %arg1: i32, %arg2: i32, %arg3: memref<16x32xbf16, #tpu.memory_space<vmem>>, %arg4: memref<16x32xbf16, #tpu.memory_space<vmem>>, %arg5: memref<32x128xbf16, #tpu.memory_space<vmem>>, %arg6: memref<1x128xf32, #tpu.memory_space<vmem>>, %arg7: memref<1x8x128xf32, #tpu.memory_space<vmem>>, %arg8: memref<16x128xf32, #tpu.memory_space<vmem>>, %arg9: memref<16x128xf32, #tpu.memory_space<vmem>>, %arg10: memref<16x1xf32, #tpu.memory_space<vmem>>, %arg11: memref<16x1xf32, #tpu.memory_space<vmem>>, %arg12: memref<16x1xi32, #tpu.memory_space<vmem>>, %arg13: memref<16x1xi32, #tpu.memory_space<vmem>>) attributes {dimension_semantics = [#tpu.dimension_semantics<parallel>, #tpu.dimension_semantics<arbitrary>, #tpu.dimension_semantics<arbitrary>], iteration_bounds = array<i64: 1, 1, 1>, scalar_prefetch = 0 : i64, scratch_operands = 6 : i64, tpu.core_type = #tpu.core_type<tc>, window_params = [{transform_indices = @transform_0, window_bounds = array<i64: 16, 32>}, {transform_indices = @transform_1, window_bounds = array<i64: 16, 32>}, {transform_indices = @transform_2, window_bounds = array<i64: 32, 128>}, {transform_indices = @transform_3, window_bounds = array<i64: 1, 128>}, {transform_indices = @transform_4, window_bounds = array<i64: 1, 8, 128>}]} {
    %c0_i32 = arith.constant 0 : i32
    %0 = arith.cmpi eq, %arg2, %c0_i32 : i32
    %1 = arith.extui %0 : i1 to i32
    %c0_i32_0 = arith.constant 0 : i32
    %2 = arith.cmpi ne, %1, %c0_i32_0 : i32
    scf.if %2 {
      %cst_17 = arith.constant 0.000000e+00 : f32
      %17 = vector.broadcast %cst_17 : f32 to vector<16x128xf32>
      %c0_18 = arith.constant 0 : index
      %c0_19 = arith.constant 0 : index
      %18 = vector.load %arg8[%c0_18, %c0_19] : memref<16x128xf32, #tpu.memory_space<vmem>>, vector<16x128xf32>
      tpu.vector_store %arg8[%c0_18, %c0_19], %17 {strides = array<i32>} : memref<16x128xf32, #tpu.memory_space<vmem>>, vector<16x128xf32>,
      %cst_20 = arith.constant 0.000000e+00 : f32
      %19 = vector.broadcast %cst_20 : f32 to vector<16x128xf32>
      %c0_21 = arith.constant 0 : index
      %c0_22 = arith.constant 0 : index
      %20 = vector.load %arg9[%c0_21, %c0_22] : memref<16x128xf32, #tpu.memory_space<vmem>>, vector<16x128xf32>
      tpu.vector_store %arg9[%c0_21, %c0_22], %19 {strides = array<i32>} : memref<16x128xf32, #tpu.memory_space<vmem>>, vector<16x128xf32>,
    } else {
    }
    %c0 = arith.constant 0 : index
    %c0_1 = arith.constant 0 : index
    %3 = vector.load %arg5[%c0, %c0_1] : memref<32x128xbf16, #tpu.memory_space<vmem>>, vector<32x128xbf16>
    %c0_2 = arith.constant 0 : index
    %c0_3 = arith.constant 0 : index
    %4 = vector.load %arg8[%c0_2, %c0_3] : memref<16x128xf32, #tpu.memory_space<vmem>>, vector<16x128xf32>
    %c0_4 = arith.constant 0 : index
    %c0_5 = arith.constant 0 : index
    %5 = vector.load %arg3[%c0_4, %c0_5] : memref<16x32xbf16, #tpu.memory_space<vmem>>, vector<16x32xbf16>
    %cst = arith.constant dense<0.000000e+00> : vector<16x128xf32>
    %6 = tpu.matmul %5, %3, %cst {dimension_numbers = #tpu.dot_dimension_numbers<[1], [0], [0], [1], [0, 0, 1, 1], [], []>} : vector<16x32xbf16>, vector<32x128xbf16>, vector<16x128xf32> -> vector<16x128xf32>
    %7 = arith.addf %4, %6 : vector<16x128xf32>
    %c0_6 = arith.constant 0 : index
    %c0_7 = arith.constant 0 : index
    %8 = vector.load %arg8[%c0_6, %c0_7] : memref<16x128xf32, #tpu.memory_space<vmem>>, vector<16x128xf32>
    tpu.vector_store %arg8[%c0_6, %c0_7], %7 {strides = array<i32>} : memref<16x128xf32, #tpu.memory_space<vmem>>, vector<16x128xf32>,
    %c0_8 = arith.constant 0 : index
    %c0_9 = arith.constant 0 : index
    %9 = vector.load %arg9[%c0_8, %c0_9] : memref<16x128xf32, #tpu.memory_space<vmem>>, vector<16x128xf32>
    %c0_10 = arith.constant 0 : index
    %c0_11 = arith.constant 0 : index
    %10 = vector.load %arg4[%c0_10, %c0_11] : memref<16x32xbf16, #tpu.memory_space<vmem>>, vector<16x32xbf16>
    %cst_12 = arith.constant dense<0.000000e+00> : vector<16x128xf32>
    %11 = tpu.matmul %10, %3, %cst_12 {dimension_numbers = #tpu.dot_dimension_numbers<[1], [0], [0], [1], [0, 0, 1, 1], [], []>} : vector<16x32xbf16>, vector<32x128xbf16>, vector<16x128xf32> -> vector<16x128xf32>
    %12 = arith.addf %9, %11 : vector<16x128xf32>
    %c0_13 = arith.constant 0 : index
    %c0_14 = arith.constant 0 : index
    %13 = vector.load %arg9[%c0_13, %c0_14] : memref<16x128xf32, #tpu.memory_space<vmem>>, vector<16x128xf32>
    tpu.vector_store %arg9[%c0_13, %c0_14], %12 {strides = array<i32>} : memref<16x128xf32, #tpu.memory_space<vmem>>, vector<16x128xf32>,
    %c0_i32_15 = arith.constant 0 : i32
    %14 = arith.cmpi eq, %arg2, %c0_i32_15 : i32
    %15 = arith.extui %14 : i1 to i32
    %c0_i32_16 = arith.constant 0 : i32
    %16 = arith.cmpi ne, %15, %c0_i32_16 : i32
    scf.if %16 {
      %c0_i32_17 = arith.constant 0 : i32
      %17 = arith.cmpi eq, %arg1, %c0_i32_17 : i32
      %18 = arith.extui %17 : i1 to i32
      %c0_i32_18 = arith.constant 0 : i32
      %19 = arith.cmpi ne, %18, %c0_i32_18 : i32
      scf.if %19 {
        %cst_52 = arith.constant 0xFF800000 : f32
        %66 = vector.broadcast %cst_52 : f32 to vector<16x1xf32>
        %c0_53 = arith.constant 0 : index
        %c0_54 = arith.constant 0 : index
        %67 = vector.load %arg10[%c0_53, %c0_54] : memref<16x1xf32, #tpu.memory_space<vmem>>, vector<16x1xf32>
        tpu.vector_store %arg10[%c0_53, %c0_54], %66 {strides = array<i32>} : memref<16x1xf32, #tpu.memory_space<vmem>>, vector<16x1xf32>,
        %cst_55 = arith.constant 0xFF800000 : f32
        %68 = vector.broadcast %cst_55 : f32 to vector<16x1xf32>
        %c0_56 = arith.constant 0 : index
        %c0_57 = arith.constant 0 : index
        %69 = vector.load %arg11[%c0_56, %c0_57] : memref<16x1xf32, #tpu.memory_space<vmem>>, vector<16x1xf32>
        tpu.vector_store %arg11[%c0_56, %c0_57], %68 {strides = array<i32>} : memref<16x1xf32, #tpu.memory_space<vmem>>, vector<16x1xf32>,
        %c0_i32_58 = arith.constant 0 : i32
        %70 = vector.broadcast %c0_i32_58 : i32 to vector<16x1xi32>
        %c0_59 = arith.constant 0 : index
        %c0_60 = arith.constant 0 : index
        %71 = vector.load %arg12[%c0_59, %c0_60] : memref<16x1xi32, #tpu.memory_space<vmem>>, vector<16x1xi32>
        tpu.vector_store %arg12[%c0_59, %c0_60], %70 {strides = array<i32>} : memref<16x1xi32, #tpu.memory_space<vmem>>, vector<16x1xi32>,
        %c0_i32_61 = arith.constant 0 : i32
        %72 = vector.broadcast %c0_i32_61 : i32 to vector<16x1xi32>
        %c0_62 = arith.constant 0 : index
        %c0_63 = arith.constant 0 : index
        %73 = vector.load %arg13[%c0_62, %c0_63] : memref<16x1xi32, #tpu.memory_space<vmem>>, vector<16x1xi32>
        tpu.vector_store %arg13[%c0_62, %c0_63], %72 {strides = array<i32>} : memref<16x1xi32, #tpu.memory_space<vmem>>, vector<16x1xi32>,
      } else {
      }
      %c0_19 = arith.constant 0 : index
      %c0_20 = arith.constant 0 : index
      %20 = vector.load %arg6[%c0_19, %c0_20] : memref<1x128xf32, #tpu.memory_space<vmem>>, vector<1x128xf32>
      %21 = tpu.iota {dimensions = array<i32: 1>} : vector<16x128xi32>
      %c128_i32 = arith.constant 128 : i32
      %22 = arith.muli %arg1, %c128_i32 : i32
      %23 = vector.broadcast %22 : i32 to vector<16x128xi32>
      %24 = arith.addi %21, %23 : vector<16x128xi32>
      %c0_21 = arith.constant 0 : index
      %c0_22 = arith.constant 0 : index
      %25 = vector.load %arg8[%c0_21, %c0_22] : memref<16x128xf32, #tpu.memory_space<vmem>>, vector<16x128xf32>
      %26 = vector.broadcast %20 : vector<1x128xf32> to vector<16x128xf32>
      %27 = arith.addf %25, %26 : vector<16x128xf32>
      %cst_23 = arith.constant dense<0xFF800000> : vector<16xf32>
      %28 = vector.multi_reduction <maximumf>, %27, %cst_23 [1] : vector<16x128xf32> to vector<16xf32>
      %29 = vector.shape_cast %28 : vector<16xf32> to vector<16x1xf32>
      %30 = vector.broadcast %29 : vector<16x1xf32> to vector<16x128xf32>
      %31 = arith.cmpf oge, %27, %30 : vector<16x128xf32>
      %c1073741824_i32 = arith.constant 1073741824 : i32
      %32 = vector.broadcast %c1073741824_i32 : i32 to vector<16x128xi32>
      %33 = arith.select %31, %24, %32 : vector<16x128xi1>, vector<16x128xi32>
      %cst_24 = arith.constant dense<2147483647> : vector<16xi32>
      %34 = vector.multi_reduction <minsi>, %33, %cst_24 [1] : vector<16x128xi32> to vector<16xi32>
      %35 = vector.shape_cast %34 : vector<16xi32> to vector<16x1xi32>
      %c0_25 = arith.constant 0 : index
      %c0_26 = arith.constant 0 : index
      %36 = vector.load %arg10[%c0_25, %c0_26] : memref<16x1xf32, #tpu.memory_space<vmem>>, vector<16x1xf32>
      %37 = arith.cmpf ogt, %29, %36 : vector<16x1xf32>
      %c0_27 = arith.constant 0 : index
      %c0_28 = arith.constant 0 : index
      %38 = vector.load %arg12[%c0_27, %c0_28] : memref<16x1xi32, #tpu.memory_space<vmem>>, vector<16x1xi32>
      %39 = arith.select %37, %35, %38 : vector<16x1xi1>, vector<16x1xi32>
      %c0_29 = arith.constant 0 : index
      %c0_30 = arith.constant 0 : index
      %40 = vector.load %arg12[%c0_29, %c0_30] : memref<16x1xi32, #tpu.memory_space<vmem>>, vector<16x1xi32>
      tpu.vector_store %arg12[%c0_29, %c0_30], %39 {strides = array<i32>} : memref<16x1xi32, #tpu.memory_space<vmem>>, vector<16x1xi32>,
      %c0_31 = arith.constant 0 : index
      %c0_32 = arith.constant 0 : index
      %41 = vector.load %arg10[%c0_31, %c0_32] : memref<16x1xf32, #tpu.memory_space<vmem>>, vector<16x1xf32>
      %42 = arith.maximumf %41, %29 : vector<16x1xf32>
      %c0_33 = arith.constant 0 : index
      %c0_34 = arith.constant 0 : index
      %43 = vector.load %arg10[%c0_33, %c0_34] : memref<16x1xf32, #tpu.memory_space<vmem>>, vector<16x1xf32>
      tpu.vector_store %arg10[%c0_33, %c0_34], %42 {strides = array<i32>} : memref<16x1xf32, #tpu.memory_space<vmem>>, vector<16x1xf32>,
      %c0_35 = arith.constant 0 : index
      %c0_36 = arith.constant 0 : index
      %44 = vector.load %arg9[%c0_35, %c0_36] : memref<16x128xf32, #tpu.memory_space<vmem>>, vector<16x128xf32>
      %45 = vector.broadcast %20 : vector<1x128xf32> to vector<16x128xf32>
      %46 = arith.addf %44, %45 : vector<16x128xf32>
      %cst_37 = arith.constant dense<0xFF800000> : vector<16xf32>
      %47 = vector.multi_reduction <maximumf>, %46, %cst_37 [1] : vector<16x128xf32> to vector<16xf32>
      %48 = vector.shape_cast %47 : vector<16xf32> to vector<16x1xf32>
      %49 = vector.broadcast %48 : vector<16x1xf32> to vector<16x128xf32>
      %50 = arith.cmpf oge, %46, %49 : vector<16x128xf32>
      %c1073741824_i32_38 = arith.constant 1073741824 : i32
      %51 = vector.broadcast %c1073741824_i32_38 : i32 to vector<16x128xi32>
      %52 = arith.select %50, %24, %51 : vector<16x128xi1>, vector<16x128xi32>
      %cst_39 = arith.constant dense<2147483647> : vector<16xi32>
      %53 = vector.multi_reduction <minsi>, %52, %cst_39 [1] : vector<16x128xi32> to vector<16xi32>
      %54 = vector.shape_cast %53 : vector<16xi32> to vector<16x1xi32>
      %c0_40 = arith.constant 0 : index
      %c0_41 = arith.constant 0 : index
      %55 = vector.load %arg11[%c0_40, %c0_41] : memref<16x1xf32, #tpu.memory_space<vmem>>, vector<16x1xf32>
      %56 = arith.cmpf ogt, %48, %55 : vector<16x1xf32>
      %c0_42 = arith.constant 0 : index
      %c0_43 = arith.constant 0 : index
      %57 = vector.load %arg13[%c0_42, %c0_43] : memref<16x1xi32, #tpu.memory_space<vmem>>, vector<16x1xi32>
      %58 = arith.select %56, %54, %57 : vector<16x1xi1>, vector<16x1xi32>
      %c0_44 = arith.constant 0 : index
      %c0_45 = arith.constant 0 : index
      %59 = vector.load %arg13[%c0_44, %c0_45] : memref<16x1xi32, #tpu.memory_space<vmem>>, vector<16x1xi32>
      tpu.vector_store %arg13[%c0_44, %c0_45], %58 {strides = array<i32>} : memref<16x1xi32, #tpu.memory_space<vmem>>, vector<16x1xi32>,
      %c0_46 = arith.constant 0 : index
      %c0_47 = arith.constant 0 : index
      %60 = vector.load %arg11[%c0_46, %c0_47] : memref<16x1xf32, #tpu.memory_space<vmem>>, vector<16x1xf32>
      %61 = arith.maximumf %60, %48 : vector<16x1xf32>
      %c0_48 = arith.constant 0 : index
      %c0_49 = arith.constant 0 : index
      %62 = vector.load %arg11[%c0_48, %c0_49] : memref<16x1xf32, #tpu.memory_space<vmem>>, vector<16x1xf32>
      tpu.vector_store %arg11[%c0_48, %c0_49], %61 {strides = array<i32>} : memref<16x1xf32, #tpu.memory_space<vmem>>, vector<16x1xf32>,
      %c0_i32_50 = arith.constant 0 : i32
      %63 = arith.cmpi eq, %arg1, %c0_i32_50 : i32
      %64 = arith.extui %63 : i1 to i32
      %c0_i32_51 = arith.constant 0 : i32
      %65 = arith.cmpi ne, %64, %c0_i32_51 : i32
      scf.if %65 {
        %66 = tpu.iota {dimensions = array<i32: 0>} : vector<16x1xi32>
        %c16_i32 = arith.constant 16 : i32
        %67 = arith.muli %arg0, %c16_i32 : i32
        %68 = vector.broadcast %67 : i32 to vector<16x1xi32>
        %69 = arith.addi %66, %68 : vector<16x1xi32>
        %c16_i32_52 = arith.constant 16 : i32
        %70 = vector.broadcast %c16_i32_52 : i32 to vector<16x1xi32>
        %71 = arith.cmpi slt, %69, %70 : vector<16x1xi32>
        %c0_53 = arith.constant 0 : index
        %c0_54 = arith.constant 0 : index
        %72 = vector.load %arg12[%c0_53, %c0_54] : memref<16x1xi32, #tpu.memory_space<vmem>>, vector<16x1xi32>
        %c0_55 = arith.constant 0 : index
        %c0_56 = arith.constant 0 : index
        %73 = vector.load %arg13[%c0_55, %c0_56] : memref<16x1xi32, #tpu.memory_space<vmem>>, vector<16x1xi32>
        %74 = arith.cmpi ne, %72, %73 : vector<16x1xi32>
        %75 = arith.andi %71, %74 : vector<16x1xi1>
        %76 = arith.extui %75 : vector<16x1xi1> to vector<16x1xi32>
        %77 = arith.sitofp %76 : vector<16x1xi32> to vector<16x1xf32>
        %78 = vector.shape_cast %77 : vector<16x1xf32> to vector<1x16x1xf32>
        %cst_57 = arith.constant dense<0.000000e+00> : vector<1xf32>
        %79 = vector.multi_reduction <add>, %78, %cst_57 [1, 2] : vector<1x16x1xf32> to vector<1xf32>
        %80 = vector.shape_cast %79 : vector<1xf32> to vector<1x1x1xf32>
        %81 = vector.extract %80[0, 0, 0] : f32 from vector<1x1x1xf32>
        %82 = vector.broadcast %81 : f32 to vector<1x8x128xf32>
        %c0_58 = arith.constant 0 : index
        %c0_59 = arith.constant 0 : index
        %c0_60 = arith.constant 0 : index
        %83 = vector.load %arg7[%c0_58, %c0_59, %c0_60] : memref<1x8x128xf32, #tpu.memory_space<vmem>>, vector<1x8x128xf32>
        tpu.vector_store %arg7[%c0_58, %c0_59, %c0_60], %82 {strides = array<i32>} : memref<1x8x128xf32, #tpu.memory_space<vmem>>, vector<1x8x128xf32>,
      } else {
      }
    } else {
    }
    return
  }
  func.func @transform_0(%arg0: i32, %arg1: i32, %arg2: i32) -> (i32, i32) {
    %c0_i32 = arith.constant 0 : i32
    return %arg0, %arg2 : i32, i32
  }
  func.func @transform_1(%arg0: i32, %arg1: i32, %arg2: i32) -> (i32, i32) {
    %c0_i32 = arith.constant 0 : i32
    return %arg0, %arg2 : i32, i32
  }
  func.func @transform_2(%arg0: i32, %arg1: i32, %arg2: i32) -> (i32, i32) {
    %c0_i32 = arith.constant 0 : i32
    return %arg2, %arg1 : i32, i32
  }
  func.func @transform_3(%arg0: i32, %arg1: i32, %arg2: i32) -> (i32, i32) {
    %c0_i32 = arith.constant 0 : i32
    %c0_i32_0 = arith.constant 0 : i32
    return %c0_i32, %arg1 : i32, i32
  }
  func.func @transform_4(%arg0: i32, %arg1: i32, %arg2: i32) -> (i32, i32, i32) {
    %c0_i32 = arith.constant 0 : i32
    %c0_i32_0 = arith.constant 0 : i32
    %c0_i32_1 = arith.constant 0 : i32
    return %arg0, %c0_i32, %c0_i32_0 : i32, i32, i32
  }
}

</mosaic_0001>

<llo_original>
// kernel: tpu_custom_call.1
$region0: #{tpu_custom_call.1}
  #allocation0 [shape = 'u32[]', space=smem, size = 0x4, offset = 0x4, fixed_abs, tag = 'smem constant byte address 0x4 - core index']
  #allocation1 [shape = 'u32[144,128]{1,0:T(1,128)}', space=vmem, size = 0x12000, scoped, tag = 'internal scratch']
  #allocation2 [shape = 'f32[16,128]{1,0:T(8,128)}', space=vmem, size = 0x2000, scoped, tag = 'scratch operand']
  #allocation3 [shape = 'f32[16,128]{1,0:T(8,128)}', space=vmem, size = 0x2000, scoped, tag = 'scratch operand']
  #allocation4 [shape = 'f32[16,1]{1,0:T(8,128)}', space=vmem, size = 0x2000, scoped, tag = 'scratch operand']
  #allocation5 [shape = 'f32[16,1]{1,0:T(8,128)}', space=vmem, size = 0x2000, scoped, tag = 'scratch operand']
  #allocation6 [shape = 's32[16,1]{1,0:T(8,128)}', space=vmem, size = 0x2000, scoped, tag = 'scratch operand']
  #allocation7 [shape = 's32[16,1]{1,0:T(8,128)}', space=vmem, size = 0x2000, scoped, tag = 'scratch operand']
  %s0 = inlined_call_operand.hbm [shape: bf16[16,32], index: 0, kind: input, shape index: {}]
  %s1 = inlined_call_operand.hbm [shape: bf16[16,32], index: 1, kind: input, shape index: {}]
  %s2 = inlined_call_operand.hbm [shape: bf16[32,128], index: 2, kind: input, shape index: {}]
  %s3 = inlined_call_operand.vmem [shape: f32[1,128], index: 3, kind: input, shape index: {}]
  %s4 = inlined_call_operand.hbm [shape: f32[1,8,128], index: 4, kind: output, shape index: {}]
  %s5 = sld [smem:[#allocation0]]
  $region54: #{tpu_custom_call.1} parent=0
    _
  %s7 = ssub.s32 1, %s5
  %s8 = scalar_select 0, %s7, %s5
  $region1: #{tpu_custom_call.1} parent=0
    #allocation8 [shape = 'u8[4096]{0}', space=vmem, size = 0x1000, scoped, tag = 'input window, operand 0, single buffered']
    #allocation9 [shape = 's32[1]{0}', space=sflag, size = 0x4, scoped, tag = 'scoped memory for tpu_custom_call.1']
    #allocation10 [shape = 's32[1]{0}', space=sflag, size = 0x4, scoped, tag = 'scoped memory for tpu_custom_call.1']
    #allocation11 [shape = 'u8[4096]{0}', space=vmem, size = 0x1000, scoped, tag = 'input window, operand 1, single buffered']
    #allocation12 [shape = 's32[1]{0}', space=sflag, size = 0x4, scoped, tag = 'scoped memory for tpu_custom_call.1']
    #allocation13 [shape = 'u8[8192]{0}', space=vmem, size = 0x2000, scoped, tag = 'input window, operand 2, single buffered']
    #allocation14 [shape = 'u8[4096]{0}', space=vmem, size = 0x1000, scoped, tag = 'output window, operand 0, single buffered']
    %9 = vsyncpa [#allocation9], 0
    %10 = vsyncpa [#allocation12], 0
    %11 = vsyncpa [#allocation10], 0
    // Predicated region
    $region2: #{tpu_custom_call.1} parent=1 // pred_check
      _
    $region3: #{tpu_custom_call.1} parent=1 // pred_check_branch
      %13 = sbr.rel (0) target = $region5
    $region4: #{tpu_custom_call.1} parent=1 // pred_region
      %s15 = ssub.s32 128, 128
      %16 = vsyncadd [#allocation9], %s15
      %s17 = sshll.u32 [#allocation8], 4
      %s18 = int_to_ptr.vmem [resolvable:$true] %s17
      %23 = dma.hbm_to_vmem [thread:$0]  %s0, 128, %s18, [#allocation9], 64, 64, 4
    $region5: #{tpu_custom_call.1} parent=1 // pred_fallthru
      _
    // Predicated region
    $region6: #{tpu_custom_call.1} parent=1 // pred_check
      _
    $region7: #{tpu_custom_call.1} parent=1 // pred_check_branch
      %25 = sbr.rel (0) target = $region9
    $region8: #{tpu_custom_call.1} parent=1 // pred_region
      %s27 = ssub.s32 128, 128
      %28 = vsyncadd [#allocation12], %s27
      %s29 = sshll.u32 [#allocation11], 4
      %s30 = int_to_ptr.vmem [resolvable:$true] %s29
      %35 = dma.hbm_to_vmem [thread:$0]  %s1, 128, %s30, [#allocation12], 64, 64, 4
    $region9: #{tpu_custom_call.1} parent=1 // pred_fallthru
      _
    // Predicated region
    $region10: #{tpu_custom_call.1} parent=1 // pred_check
      _
    $region11: #{tpu_custom_call.1} parent=1 // pred_check_branch
      %37 = sbr.rel (0) target = $region13
    $region12: #{tpu_custom_call.1} parent=1 // pred_region
      %s39 = ssub.s32 256, 256
      %40 = vsyncadd [#allocation12], %s39
      %s41 = sshll.u32 [#allocation13], 4
      %s42 = int_to_ptr.vmem [resolvable:$true] %s41
      %47 = dma.hbm_to_vmem [thread:$0]  %s2, 256, %s42, [#allocation12], 64, 64, 4
    $region13: #{tpu_custom_call.1} parent=1 // pred_fallthru
      _
    // Predicated region
    $region14: #{tpu_custom_call.1} parent=1 // pred_check
      _
    $region15: #{tpu_custom_call.1} parent=1 // pred_check_branch
      %49 = sbr.rel (0) target = $region17
    $region16: #{tpu_custom_call.1} parent=1 // pred_region
      _
    $region17: #{tpu_custom_call.1} parent=1 // pred_fallthru
      _
    // Predicated region
    $region18: #{tpu_custom_call.1} parent=1 // pred_check
      _
    $region19: #{tpu_custom_call.1} parent=1 // pred_check_branch
      %51 = sbr.rel (0) target = $region21
    $region20: #{tpu_custom_call.1} parent=1 // pred_region
      %52 = dma.done [#allocation9], 128
    $region21: #{tpu_custom_call.1} parent=1 // pred_fallthru
      _
    // Predicated region
    $region22: #{tpu_custom_call.1} parent=1 // pred_check
      _
    $region23: #{tpu_custom_call.1} parent=1 // pred_check_branch
      %54 = sbr.rel (0) target = $region25
    $region24: #{tpu_custom_call.1} parent=1 // pred_region
      %55 = dma.done [#allocation12], 128
    $region25: #{tpu_custom_call.1} parent=1 // pred_fallthru
      _
    // Predicated region
    $region26: #{tpu_custom_call.1} parent=1 // pred_check
      _
    $region27: #{tpu_custom_call.1} parent=1 // pred_check_branch
      %57 = sbr.rel (0) target = $region29
    $region28: #{tpu_custom_call.1} parent=1 // pred_region
      %58 = dma.done [#allocation12], 256
    $region29: #{tpu_custom_call.1} parent=1 // pred_fallthru
      _
    %p60 = scmp.eq.s32.totalorder 0, 0
    // Predicated region
    $region30: #{tpu_custom_call.1} parent=1 // pred_check
      %p61 = pneg %p60
    $region31: #{tpu_custom_call.1} parent=1 // pred_check_branch
      %63 = sbr.rel (%p61) target = $region33
    $region32: #{tpu_custom_call.1} parent=1 // pred_region
      %64 = vst [vmem:[#allocation2] sm:$0xff] 0.0
      %65 = vst [vmem:[#allocation2 + $0x8] sm:$0xff] 0.0
      %66 = vst [vmem:[#allocation3] sm:$0xff] 0.0
      %67 = vst [vmem:[#allocation3 + $0x8] sm:$0xff] 0.0
    $region33: #{tpu_custom_call.1} parent=1 // pred_fallthru
      _
    %v68 = vld [vmem:[#allocation13] sm:$0xf]
    %v69 = vld [vmem:[#allocation13 + $0x4] sm:$0xf]
    %v70 = vld [vmem:[#allocation13 + $0x8] sm:$0xf]
    %v71 = vld [vmem:[#allocation13 + $0xc] sm:$0xf]
    %v72 = vld [vmem:[#allocation2] sm:$0xff]
    %v73 = vld [vmem:[#allocation2 + $0x8] sm:$0xff]
    %v74 = vld [vmem:[#allocation8] sm:$0xf]
    %v75 = vld [vmem:[#allocation8 + $0x4] sm:$0xf]
    %v78 = vunpack.c.l.b16 %v74
    %v79 = vunpack.c.l.b16 %v75
    %v80 = vpack.c.b16 %v79, %v78
    %v85 = vunpack.c.l.b16 %v68
    %v86 = vunpack.c.l.b16 %v69
    %v87 = vunpack.c.l.b16 %v70
    %v88 = vunpack.c.l.b16 %v71
    %v89 = vpack.c.b16 %v86, %v85
    %v90 = vpack.c.b16 %v88, %v87
    %vm93 = vcmask 261120
    %v95 = vsel %vm93, %v80, 0
    %97 = vmatprep.subr.bf16.mxu0 0
    %98 = vmatpush1.bf16.msra.mxu0 0
    %99 = vmatprep.subr.bf16.mxu0 0
    %100 = vmatpush1.bf16.msra.mxu0 0
    %101 = vmatprep.subr.bf16.mxu0 0
    %102 = vmatpush1.bf16.msra.mxu0 0
    %103 = vmatprep.subr.bf16.mxu0 0
    %104 = vmatpush1.bf16.msra.mxu0 0
    %105 = vmatprep.subr.bf16.mxu0 0
    %106 = vmatpush1.bf16.msra.mxu0 0
    %107 = vmatprep.subr.bf16.mxu0 0
    %108 = vmatpush1.bf16.msra.mxu0 0
    %109 = vmatprep.subr.bf16.mxu0 0
    %110 = vmatpush1.bf16.msra.mxu0 %v90
    %111 = vmatprep.subr.bf16.mxu0 0
    %112 = vmatpush1.bf16.msra.mxu0 %v89
    %113 = vmatprep.subr.bf16.mxu0 0
    %114 = vmatpush2.bf16.msra.mxu0 0
    %115 = vmatprep.subr.bf16.mxu0 0
    %116 = vmatpush2.bf16.msra.mxu0 0
    %117 = vmatprep.subr.bf16.mxu0 0
    %118 = vmatpush2.bf16.msra.mxu0 0
    %119 = vmatprep.subr.bf16.mxu0 0
    %120 = vmatpush2.bf16.msra.mxu0 0
    %121 = vmatprep.subr.bf16.mxu0 0
    %122 = vmatpush2.bf16.msra.mxu0 0
    %123 = vmatprep.subr.bf16.mxu0 0
    %124 = vmatpush2.bf16.msra.mxu0 0
    %125 = vmatprep.subr.bf16.mxu0 0
    %126 = vmatpush2.bf16.msra.mxu0 0
    %127 = vmatprep.subr.bf16.mxu0 0
    %128 = vmatpush2.bf16.msra.mxu0 0
    %129 = vmatprep.mubr.bf16.mxu0 0
    %130 = vmatmul.mubr.bf16.gmra.mxu0 %v95
    %v131 = vpop.f32.mrf.mxu0
    %v132 = vadd.f32 0.0, %v131
    %v133 = vpop.f32.mrf.mxu0
    %v134 = vpop.f32.mrf.mxu0
    %v135 = vadd.f32 0.0, %v134
    %v136 = vpop.f32.mrf.mxu0
    %137 = vdwg.mxu0
    %v138 = vadd.f32 %v72, %v132
    %v139 = vadd.f32 %v73, %v135
    %140 = vst [vmem:[#allocation2] sm:$0xff] %v138
    %141 = vst [vmem:[#allocation2 + $0x8] sm:$0xff] %v139
    %v142 = vld [vmem:[#allocation3] sm:$0xff]
    %v143 = vld [vmem:[#allocation3 + $0x8] sm:$0xff]
    %v144 = vld [vmem:[#allocation11] sm:$0xf]
    %v145 = vld [vmem:[#allocation11 + $0x4] sm:$0xf]
    %v148 = vunpack.c.l.b16 %v144
    %v149 = vunpack.c.l.b16 %v145
    %v150 = vpack.c.b16 %v149, %v148
    %v152 = vsel %vm93, %v150, 0
    %154 = vmatprep.subr.bf16.mxu0 0
    %155 = vmatpush1.bf16.msra.mxu0 0
    %156 = vmatprep.subr.bf16.mxu0 0
    %157 = vmatpush1.bf16.msra.mxu0 0
    %158 = vmatprep.subr.bf16.mxu0 0
    %159 = vmatpush1.bf16.msra.mxu0 0
    %160 = vmatprep.subr.bf16.mxu0 0
    %161 = vmatpush1.bf16.msra.mxu0 0
    %162 = vmatprep.subr.bf16.mxu0 0
    %163 = vmatpush1.bf16.msra.mxu0 0
    %164 = vmatprep.subr.bf16.mxu0 0
    %165 = vmatpush1.bf16.msra.mxu0 0
    %166 = vmatprep.subr.bf16.mxu0 0
    %167 = vmatpush1.bf16.msra.mxu0 %v90
    %168 = vmatprep.subr.bf16.mxu0 0
    %169 = vmatpush1.bf16.msra.mxu0 %v89
    %170 = vmatprep.subr.bf16.mxu0 0
    %171 = vmatpush2.bf16.msra.mxu0 0
    %172 = vmatprep.subr.bf16.mxu0 0
    %173 = vmatpush2.bf16.msra.mxu0 0
    %174 = vmatprep.subr.bf16.mxu0 0
    %175 = vmatpush2.bf16.msra.mxu0 0
    %176 = vmatprep.subr.bf16.mxu0 0
    %177 = vmatpush2.bf16.msra.mxu0 0
    %178 = vmatprep.subr.bf16.mxu0 0
    %179 = vmatpush2.bf16.msra.mxu0 0
    %180 = vmatprep.subr.bf16.mxu0 0
    %181 = vmatpush2.bf16.msra.mxu0 0
    %182 = vmatprep.subr.bf16.mxu0 0
    %183 = vmatpush2.bf16.msra.mxu0 0
    %184 = vmatprep.subr.bf16.mxu0 0
    %185 = vmatpush2.bf16.msra.mxu0 0
    %186 = vmatprep.mubr.bf16.mxu0 0
    %187 = vmatmul.mubr.bf16.gmra.mxu0 %v152
    %v188 = vpop.f32.mrf.mxu0
    %v189 = vadd.f32 0.0, %v188
    %v190 = vpop.f32.mrf.mxu0
    %v191 = vpop.f32.mrf.mxu0
    %v192 = vadd.f32 0.0, %v191
    %v193 = vpop.f32.mrf.mxu0
    %194 = vdwg.mxu0
    %v195 = vadd.f32 %v142, %v189
    %v196 = vadd.f32 %v143, %v192
    %197 = vst [vmem:[#allocation3] sm:$0xff] %v195
    %198 = vst [vmem:[#allocation3 + $0x8] sm:$0xff] %v196
    // Predicated region
    $region34: #{tpu_custom_call.1} parent=1 // pred_check
      %p199 = pneg %p60
    $region35: #{tpu_custom_call.1} parent=1 // pred_check_branch
      %201 = sbr.rel (%p199) target = $region37
    $region36: #{tpu_custom_call.1} parent=1 // pred_region
      %p202 = scmp.eq.s32.totalorder 0, 0
      // Predicated region
      $region38: #{tpu_custom_call.1} parent=36 // pred_check
        %p203 = pneg %p202
      $region39: #{tpu_custom_call.1} parent=36 // pred_check_branch
        %205 = sbr.rel (%p203) target = $region41
      $region40: #{tpu_custom_call.1} parent=36 // pred_region
        %vm206 = vcmask 7168
        %207 = vst.msk [vmem:[#allocation4] sm:$0xff] %vm206, -inf
        %208 = vst.msk [vmem:[#allocation4 + $0x8] sm:$0xff] %vm206, -inf
        %209 = vst.msk [vmem:[#allocation5] sm:$0xff] %vm206, -inf
        %210 = vst.msk [vmem:[#allocation5 + $0x8] sm:$0xff] %vm206, -inf
        %211 = vst.msk [vmem:[#allocation6] sm:$0xff] %vm206, 0
        %212 = vst.msk [vmem:[#allocation6 + $0x8] sm:$0xff] %vm206, 0
        %213 = vst.msk [vmem:[#allocation7] sm:$0xff] %vm206, 0
        %214 = vst.msk [vmem:[#allocation7 + $0x8] sm:$0xff] %vm206, 0
      $region41: #{tpu_custom_call.1} parent=36 // pred_fallthru
        _
      %v215 = vld [vmem:[%s3] sm:$0x1]
      %v216 = vlaneseq
      %v217 = vand.u32 %v216, 127
      %s218 = smul.u32 0, 128
      %v219 = vstv %s218
      %v220 = vadd.s32 %v217, %v219
      %v221 = vld [vmem:[#allocation2] sm:$0xff]
      %v222 = vld [vmem:[#allocation2 + $0x8] sm:$0xff]
      %v224 = vlaneseq
      %v225 = vshrl.u32 %v224, 7
      %v226 = vsub.s32 0, %v225
      %v227 = vrot.slane %v215, %v226
      %v229 = vadd.f32 %v221, %v227
      %v230 = vadd.f32 %v222, %v227
      %231 = vmax.xlane.f32.xlu0 %v229
      %v232 = vpop.xlane.xlu0 %231
      %233 = vmax.xlane.f32.xlu0 %v230
      %v234 = vpop.xlane.xlu0 %233
      %vm235 = vcmp.ge.f32.partialorder %v229, %v232
      %vm236 = vcmp.ge.f32.partialorder %v230, %v234
      %v237 = vsel %vm235, %v220, 1073741824
      %v238 = vsel %vm236, %v220, 1073741824
      %v239 = vand.u32 %v237, 65535
      %v240 = vshra.s32 %v237, 16
      %v241 = vcvt.s32.f32 %v239
      %v242 = vcvt.s32.f32 %v240
      %243 = vmin.xlane.f32.xlu0 %v242
      %v244 = vpop.xlane.xlu0 %243
      %vm245 = vcmp.eq.f32.partialorder %v242, %v244
      %v246 = vsel %vm245, %v241, inf
      %247 = vmin.xlane.f32.xlu0 %v246
      %v248 = vpop.xlane.xlu0 %247
      %v249 = vcvt.f32.s32 %v248
      %v250 = vcvt.f32.s32 %v244
      %v251 = vshll.u32 %v250, 16
      %v252 = vadd.s32 %v251, %v249
      %v253 = vand.u32 %v238, 65535
      %v254 = vshra.s32 %v238, 16
      %v255 = vcvt.s32.f32 %v253
      %v256 = vcvt.s32.f32 %v254
      %257 = vmin.xlane.f32.xlu0 %v256
      %v258 = vpop.xlane.xlu0 %257
      %vm259 = vcmp.eq.f32.partialorder %v256, %v258
      %v260 = vsel %vm259, %v255, inf
      %261 = vmin.xlane.f32.xlu0 %v260
      %v262 = vpop.xlane.xlu0 %261
      %v263 = vcvt.f32.s32 %v262
      %v264 = vcvt.f32.s32 %v258
      %v265 = vshll.u32 %v264, 16
      %v266 = vadd.s32 %v265, %v263
      %v267 = vld [vmem:[#allocation4] sm:$0xff]
      %v268 = vld [vmem:[#allocation4 + $0x8] sm:$0xff]
      %vm269 = vcmp.gt.f32.partialorder %v232, %v267
      %vm270 = vcmp.gt.f32.partialorder %v234, %v268
      %v271 = vld [vmem:[#allocation6] sm:$0xff]
      %v272 = vld [vmem:[#allocation6 + $0x8] sm:$0xff]
      %v273 = vsel %vm269, %v252, %v271
      %v274 = vsel %vm270, %v266, %v272
      %vm275 = vcmask 7168
      %276 = vst.msk [vmem:[#allocation6] sm:$0xff] %vm275, %v273
      %277 = vst.msk [vmem:[#allocation6 + $0x8] sm:$0xff] %vm275, %v274
      %v278 = vld [vmem:[#allocation4] sm:$0xff]
      %v279 = vld [vmem:[#allocation4 + $0x8] sm:$0xff]
      %v280 = vmax.f32 %v278, %v232
      %v281 = vmax.f32 %v279, %v234
      %282 = vst.msk [vmem:[#allocation4] sm:$0xff] %vm275, %v280
      %283 = vst.msk [vmem:[#allocation4 + $0x8] sm:$0xff] %vm275, %v281
      %v284 = vld [vmem:[#allocation3] sm:$0xff]
      %v285 = vld [vmem:[#allocation3 + $0x8] sm:$0xff]
      %v286 = vadd.f32 %v284, %v227
      %v287 = vadd.f32 %v285, %v227
      %288 = vmax.xlane.f32.xlu0 %v286
      %v289 = vpop.xlane.xlu0 %288
      %290 = vmax.xlane.f32.xlu0 %v287
      %v291 = vpop.xlane.xlu0 %290
      %vm292 = vcmp.ge.f32.partialorder %v286, %v289
      %vm293 = vcmp.ge.f32.partialorder %v287, %v291
      %v294 = vsel %vm292, %v220, 1073741824
      %v295 = vsel %vm293, %v220, 1073741824
      %v296 = vand.u32 %v294, 65535
      %v297 = vshra.s32 %v294, 16
      %v298 = vcvt.s32.f32 %v296
      %v299 = vcvt.s32.f32 %v297
      %300 = vmin.xlane.f32.xlu0 %v299
      %v301 = vpop.xlane.xlu0 %300
      %vm302 = vcmp.eq.f32.partialorder %v299, %v301
      %v303 = vsel %vm302, %v298, inf
      %304 = vmin.xlane.f32.xlu0 %v303
      %v305 = vpop.xlane.xlu0 %304
      %v306 = vcvt.f32.s32 %v305
      %v307 = vcvt.f32.s32 %v301
      %v308 = vshll.u32 %v307, 16
      %v309 = vadd.s32 %v308, %v306
      %v310 = vand.u32 %v295, 65535
      %v311 = vshra.s32 %v295, 16
      %v312 = vcvt.s32.f32 %v310
      %v313 = vcvt.s32.f32 %v311
      %314 = vmin.xlane.f32.xlu0 %v313
      %v315 = vpop.xlane.xlu0 %314
      %vm316 = vcmp.eq.f32.partialorder %v313, %v315
      %v317 = vsel %vm316, %v312, inf
      %318 = vmin.xlane.f32.xlu0 %v317
      %v319 = vpop.xlane.xlu0 %318
      %v320 = vcvt.f32.s32 %v319
      %v321 = vcvt.f32.s32 %v315
      %v322 = vshll.u32 %v321, 16
      %v323 = vadd.s32 %v322, %v320
      %v324 = vld [vmem:[#allocation5] sm:$0xff]
      %v325 = vld [vmem:[#allocation5 + $0x8] sm:$0xff]
      %vm326 = vcmp.gt.f32.partialorder %v289, %v324
      %vm327 = vcmp.gt.f32.partialorder %v291, %v325
      %v328 = vld [vmem:[#allocation7] sm:$0xff]
      %v329 = vld [vmem:[#allocation7 + $0x8] sm:$0xff]
      %v330 = vsel %vm326, %v309, %v328
      %v331 = vsel %vm327, %v323, %v329
      %332 = vst.msk [vmem:[#allocation7] sm:$0xff] %vm275, %v330
      %333 = vst.msk [vmem:[#allocation7 + $0x8] sm:$0xff] %vm275, %v331
      %v334 = vld [vmem:[#allocation5] sm:$0xff]
      %v335 = vld [vmem:[#allocation5 + $0x8] sm:$0xff]
      %v336 = vmax.f32 %v334, %v289
      %v337 = vmax.f32 %v335, %v291
      %338 = vst.msk [vmem:[#allocation5] sm:$0xff] %vm275, %v336
      %339 = vst.msk [vmem:[#allocation5 + $0x8] sm:$0xff] %vm275, %v337
      // Predicated region
      $region42: #{tpu_custom_call.1} parent=36 // pred_check
        %p340 = pneg %p202
      $region43: #{tpu_custom_call.1} parent=36 // pred_check_branch
        %342 = sbr.rel (%p340) target = $region45
      $region44: #{tpu_custom_call.1} parent=36 // pred_region
        %v343 = vlaneseq
        %v344 = vshrl.u32 %v343, 7
        %v345 = vadd.s32 %v344, 8
        %s346 = smul.u32 0, 16
        %v347 = vstv %s346
        %v348 = vadd.s32 %v344, %v347
        %v349 = vadd.s32 %v345, %v347
        %vm350 = vcmp.lt.s32.totalorder %v348, 16
        %vm351 = vcmp.lt.s32.totalorder %v349, 16
        %v352 = vld [vmem:[#allocation6] sm:$0xff]
        %v353 = vld [vmem:[#allocation6 + $0x8] sm:$0xff]
        %v354 = vld [vmem:[#allocation7] sm:$0xff]
        %v355 = vld [vmem:[#allocation7 + $0x8] sm:$0xff]
        %vm356 = vcmp.ne.s32.totalorder %v352, %v354
        %vm357 = vcmp.ne.s32.totalorder %v353, %v355
        %vm358 = vmand %vm350, %vm356
        %vm359 = vmand %vm351, %vm357
        %v360 = vsel %vm358, 1, 0
        %v361 = vsel %vm359, 1, 0
        %v362 = vcvt.s32.f32 %v360
        %v363 = vcvt.s32.f32 %v361
        %v364 = vsel %vm275, %v362, 0.0
        %v365 = vsel %vm275, %v363, 0.0
        %v366 = vadd.f32 %v364, %v365
        %367 = vadd.xlane.f32.xlu0 %v366
        %v368 = vpop.xlane.xlu0 %367
        %v369 = vrot.slane %v368, 4
        %v370 = vadd.f32 %v368, %v369
        %v371 = vrot.slane %v370, 2
        %v372 = vadd.f32 %v370, %v371
        %v373 = vrot.slane %v372, 1
        %v374 = vadd.f32 %v372, %v373
        %s375 = vtos %v374
        %v376 = vstv %s375
        %377 = vst [vmem:[#allocation14] sm:$0xff] %v376
      $region45: #{tpu_custom_call.1} parent=36 // pred_fallthru
        _
    $region37: #{tpu_custom_call.1} parent=1 // pred_fallthru
      _
    // Predicated region
    $region46: #{tpu_custom_call.1} parent=1 // pred_check
      _
    $region47: #{tpu_custom_call.1} parent=1 // pred_check_branch
      %379 = sbr.rel (0) target = $region49
    $region48: #{tpu_custom_call.1} parent=1 // pred_region
      %s381 = ssub.s32 128, 128
      %382 = vsyncadd [#allocation10], %s381
      %s384 = sshll.u32 [#allocation14], 4
      %s385 = int_to_ptr.vmem [resolvable:$true] %s384
      %387 = dma.vmem_to_hbm [thread:$0]  %s385, 128, %s4, [#allocation10]
    $region49: #{tpu_custom_call.1} parent=1 // pred_fallthru
      _
    // Predicated region
    $region50: #{tpu_custom_call.1} parent=1 // pred_check
      _
    $region51: #{tpu_custom_call.1} parent=1 // pred_check_branch
      %389 = sbr.rel (0) target = $region53
    $region52: #{tpu_custom_call.1} parent=1 // pred_region
      %390 = dma.done [#allocation10], 128
    $region53: #{tpu_custom_call.1} parent=1 // pred_fallthru
      _
    %391 = vsyncpa [#allocation9], 1
    %392 = vsyncpa [#allocation12], 1
    %393 = vsyncpa [#allocation10], 1

</llo_original>
